<compile_context>
chip_gen: v5e
topology: v5e:2x2
jax: 0.10.0
libtpu: 0.0.40
codegen_flags: <defaults>
</compile_context>

<pallas_src>
import numpy as np
import jax
import jax.numpy as jnp
from jax.experimental import pallas as pl
from jax.experimental.pallas import tpu as pltpu


def make_positional_encoding(length: int, depth: int, dtype=jnp.float32) -> jnp.ndarray:
    """Deterministic sin/cos table, identical to the PyTorch __init__.

    Build it in the model dtype up front so the forward pass never pays an
    extra cast (an un-fused HBM read+write of pe) per call.
    """
    assert depth % 2 == 0, "depth must be even (sin/cos halves)"
    half = depth // 2
    positions = np.arange(length)[:, np.newaxis]                  # (L, 1)
    depths = np.arange(half)[np.newaxis, :] / half                # (1, D/2)
    angle_rates = 1.0 / (10000.0 ** depths)                       # (1, D/2)
    angle_rads = positions * angle_rates                          # (L, D/2)
    pe = np.concatenate([np.sin(angle_rads), np.cos(angle_rads)], axis=-1)
    return jnp.asarray(pe, dtype=dtype)                           # (L, D)


def _pe_add_kernel(x_ref, pe_ref, o_ref):
    # x_ref / o_ref: (tb, tc) tile of the flattened input / output.
    # pe_ref:        (pe_rows, tc) tile; pe_rows == tb (fold path) or 1 (broadcast).
    o_ref[...] = x_ref[...] + pe_ref[...]


def _round_up(v, m):
    return ((v + m - 1) // m) * m


def _sublane_multiple(dtype):
    """Rows per packed vreg sublane group: 8 (f32), 16 (bf16), 32 (int8/fp8)."""
    return {4: 8, 2: 16, 1: 32}.get(jnp.dtype(dtype).itemsize, 8)


def _pick_fold(B, L, sub):
    """When B < sub, fold a divisor f of L (multiple of sub) into the row axis
    so row blocks (tb = f) stay sublane-dense.  Returns 1 if no clean fold."""
    if B >= sub:
        return 1
    for f in range(sub, L + 1):
        if L % f == 0 and f % sub == 0:
            return f
    return 1


def _tpu_memory_params():
    """Generation-aware (tile_bytes, vmem_limit_bytes); conservative fallback."""
    tile_bytes, vmem_limit = 2 * 1024 * 1024, None
    try:
        info = pltpu.get_tpu_info()
        cap = getattr(info, "vmem_capacity_bytes", None)
        if cap is not None:
            if cap <= 80 * 1024 * 1024:
                # v7x class: 64 MiB VMEM/TC, 3.2 TB/s HBM -> big tiles to
                # amortize the ~0.35 us per-grid-step overhead.
                tile_bytes, vmem_limit = 8 * 1024 * 1024, 44 * 1024 * 1024
            else:
                # v5e/v6e class: 128 MiB physical VMEM; raise the scoped limit
                # explicitly so 4 MiB double-buffered tiles always fit.
                tile_bytes, vmem_limit = 4 * 1024 * 1024, 48 * 1024 * 1024
    except Exception:
        pass
    return tile_bytes, vmem_limit


def _vmem_need_bytes(tb, tc, pe_rows, sub, itemsize):
    """Double-buffered x + out tiles plus the double-buffered pe sliver,
    accounting for physical sublane/lane padding."""
    tb_p = _round_up(tb, sub)
    tc_p = _round_up(tc, 128)
    pe_p = _round_up(pe_rows, sub)
    return (2 * 2 * tb_p * tc_p + 2 * pe_p * tc_p) * itemsize


def _choose_tiles(R, C, f, sub, itemsize, tile_bytes):
    """Pick (tb, tc) so one x tile is ~tile_bytes and blocks obey (8,128)."""
    tile_elems = max(1, tile_bytes // itemsize)
    if f > 1:
        tb = f                                      # one batch's fold per row-block
        tc_cap = max(128, (tile_elems // tb // 128) * 128)
        tc = C if C <= tc_cap else tc_cap
    else:
        tb0 = R if R <= sub else sub                # seed: one packed vreg depth
        tc_cap = max(128, (tile_elems // tb0 // 128) * 128)
        tc = C if C <= tc_cap else tc_cap
        rows_budget = max(1, tile_elems // tc)
        if R <= rows_budget:
            tb = R                                  # full array dim: always legal
        else:
            tb = max(sub, (rows_budget // sub) * sub)
    return tb, tc


def _positional_encoding_pallas(x, pe, *, tile_bytes=None, vmem_limit_bytes=None):
    B, L, D = x.shape
    itemsize = jnp.dtype(x.dtype).itemsize
    sub = _sublane_multiple(x.dtype)

    auto_tile, auto_limit = _tpu_memory_params()
    if tile_bytes is None:
        tile_bytes = auto_tile
    if vmem_limit_bytes is None:
        vmem_limit_bytes = auto_limit

    # Row-major reshapes are metadata-only. Fold L into rows when B is small.
    f = _pick_fold(B, L, sub)
    R, C = B * f, (L * D) // f
    x2 = x.reshape(R, C)
    pe2 = pe.reshape(f, C)

    tb, tc = _choose_tiles(R, C, f, sub, itemsize, tile_bytes)
    nb, nc = pl.cdiv(R, tb), pl.cdiv(C, tc)

    # Grid-collapse guard: keep >= 8 programs on large inputs so v7x megacore
    # can shard across both TensorCores.  Split columns only (keeps pe streamed
    # from HBM exactly once per column block).  No-op on single-TC v5e/v6e.
    total_bytes = R * C * itemsize
    min_prog = 8 if total_bytes >= (4 << 20) else 2
    if nb * nc < min_prog and C >= 256:
        want_nc = min(pl.cdiv(min_prog, nb), C // 128)
        if want_nc > nc:
            tc = max(128, _round_up(pl.cdiv(C, want_nc), 128))
            nc = pl.cdiv(C, tc)

    # Keep double-buffered tiles inside the scoped VMEM limit (with headroom).
    cap = vmem_limit_bytes if vmem_limit_bytes is not None else (16 << 20)
    while _vmem_need_bytes(tb, tc, f, sub, itemsize) > int(0.85 * cap) and tc > 128:
        tc = max(128, _round_up(tc // 2, 128))
        nc = pl.cdiv(C, tc)
    if _vmem_need_bytes(tb, tc, f, sub, itemsize) > int(0.85 * cap):
        # Pathological fold size: plain XLA add is safe and near-roofline.
        return x + pe[None, :, :]

    cost = pl.CostEstimate(
        flops=R * C,
        transcendentals=0,
        bytes_accessed=(2 * R * C + f * C) * itemsize,
    )

    out2 = pl.pallas_call(
        _pe_add_kernel,
        out_shape=jax.ShapeDtypeStruct((R, C), x.dtype),
        grid_spec=pltpu.PrefetchScalarGridSpec(
            num_scalar_prefetch=0,
            # Columns outer, rows inner: pe block index changes only on the
            # outer axis, so pe is fetched from HBM once per column block.
            grid=(nc, nb),
            in_specs=[
                pl.BlockSpec((tb, tc), lambda c, r: (r, c)),   # x
                pl.BlockSpec((f, tc), lambda c, r: (0, c)),    # pe (grid-slow)
            ],
            out_specs=pl.BlockSpec((tb, tc), lambda c, r: (r, c)),
        ),
        compiler_params=pltpu.CompilerParams(
            # Elementwise: both axes independent -> megacore sharding on v7x,
            # harmless no-op on single-TC v5e/v6e.
            dimension_semantics=("parallel", "parallel"),
            vmem_limit_bytes=vmem_limit_bytes,
        ),
        cost_estimate=cost,
    )(x2, pe2)

    return out2.reshape(B, L, D)


_PALLAS_MIN_BYTES = 1 << 20  # below ~1 MiB, XLA's fused add is already at roofline


def positional_encoding_forward(x, pe, *, force_pallas=False,
                                tile_bytes=None, vmem_limit_bytes=None):
    """x: [B, L, D], pe: [L, D] -> [B, L, D]; out = x + pe (broadcast over B)."""
    B, L, D = x.shape
    assert pe.shape == (L, D)
    if pe.dtype != x.dtype:
        # Safety net only; prefer building pe in the model dtype up front
        # (make_positional_encoding(..., dtype=x.dtype)) so this never runs.
        pe = pe.astype(x.dtype)
    if not force_pallas and x.size * jnp.dtype(x.dtype).itemsize < _PALLAS_MIN_BYTES:
        # Tiny inputs: kernel-launch / pipeline setup dwarfs the HBM transfer.
        return x + pe[None, :, :]
    return _positional_encoding_pallas(x, pe, tile_bytes=tile_bytes,
                                       vmem_limit_bytes=vmem_limit_bytes)


if __name__ == "__main__":
    key = jax.random.PRNGKey(0)
    k0, k1, k2 = jax.random.split(key, 3)

    # 1) Small shapes consistent with the module: batch=2, seq=8, depth=32.
    #    Exercises the small-batch fold path (B=2 < 8 -> f=8, rows = B*f = 16).
    B, L, D = 2, 8, 32
    x = jax.random.normal(k0, (B, L, D), dtype=jnp.float32)
    pe = make_positional_encoding(L, D, dtype=jnp.float32)
    out = jax.block_until_ready(positional_encoding_forward(x, pe, force_pallas=True))
    ref = x + pe[None, :, :]
    np.testing.assert_allclose(np.asarray(out), np.asarray(ref), rtol=1e-6, atol=1e-6)

    # 2) Multi-block path: batch + column tiling, pe reused across row blocks.
    B2, L2, D2 = 16, 32, 64
    x_big = jax.random.normal(k1, (B2, L2, D2), dtype=jnp.float32)
    pe_big = make_positional_encoding(L2, D2, dtype=jnp.float32)
    out_big = jax.block_until_ready(
        positional_encoding_forward(x_big, pe_big, force_pallas=True, tile_bytes=4096))
    ref_big = x_big + pe_big[None, :, :]
    np.testing.assert_allclose(np.asarray(out_big), np.asarray(ref_big),
                               rtol=1e-6, atol=1e-6)

    # 3) bf16 path: dtype-aware sublane multiple (16) + fold, pe built in bf16.
    B3, L3, D3 = 4, 16, 128
    x_bf = jax.random.normal(k2, (B3, L3, D3), dtype=jnp.float32).astype(jnp.bfloat16)
    pe_bf = make_positional_encoding(L3, D3, dtype=jnp.bfloat16)
    out_bf = jax.block_until_ready(positional_encoding_forward(x_bf, pe_bf,
                                                               force_pallas=True))
    ref_bf = x_bf.astype(jnp.float32) + pe_bf.astype(jnp.float32)[None, :, :]
    np.testing.assert_allclose(np.asarray(out_bf, dtype=np.float32),
                               np.asarray(ref_bf), rtol=2e-2, atol=2e-2)

    print("KERNEL_OK")
</pallas_src>

<mosaic_0001>
module attributes {stable_mosaic.version = 11 : i64} {
  func.func @_pe_add_kernel(%arg0: i32, %arg1: i32, %arg2: memref<8x32xf32, #tpu.memory_space<vmem>>, %arg3: memref<8x32xf32, #tpu.memory_space<vmem>>, %arg4: memref<8x32xf32, #tpu.memory_space<vmem>>) attributes {dimension_semantics = [#tpu.dimension_semantics<parallel>, #tpu.dimension_semantics<parallel>], iteration_bounds = array<i64: 1, 2>, scalar_prefetch = 0 : i64, scratch_operands = 0 : i64, tpu.core_type = #tpu.core_type<tc>, window_params = [{transform_indices = @transform_0, window_bounds = array<i64: 8, 32>}, {transform_indices = @transform_1, window_bounds = array<i64: 8, 32>}, {transform_indices = @transform_2, window_bounds = array<i64: 8, 32>}]} {
    %c0 = arith.constant 0 : index
    %c0_0 = arith.constant 0 : index
    %0 = vector.load %arg2[%c0, %c0_0] : memref<8x32xf32, #tpu.memory_space<vmem>>, vector<8x32xf32>
    %c0_1 = arith.constant 0 : index
    %c0_2 = arith.constant 0 : index
    %1 = vector.load %arg3[%c0_1, %c0_2] : memref<8x32xf32, #tpu.memory_space<vmem>>, vector<8x32xf32>
    %2 = arith.addf %0, %1 : vector<8x32xf32>
    %c0_3 = arith.constant 0 : index
    %c0_4 = arith.constant 0 : index
    %3 = vector.load %arg4[%c0_3, %c0_4] : memref<8x32xf32, #tpu.memory_space<vmem>>, vector<8x32xf32>
    tpu.vector_store %arg4[%c0_3, %c0_4], %2 {strides = array<i32>} : memref<8x32xf32, #tpu.memory_space<vmem>>, vector<8x32xf32>,
    return
  }
  func.func @transform_0(%arg0: i32, %arg1: i32) -> (i32, i32) {
    %c0_i32 = arith.constant 0 : i32
    return %arg1, %arg0 : i32, i32
  }
  func.func @transform_1(%arg0: i32, %arg1: i32) -> (i32, i32) {
    %c0_i32 = arith.constant 0 : i32
    %c0_i32_0 = arith.constant 0 : i32
    return %c0_i32, %arg0 : i32, i32
  }
  func.func @transform_2(%arg0: i32, %arg1: i32) -> (i32, i32) {
    %c0_i32 = arith.constant 0 : i32
    return %arg1, %arg0 : i32, i32
  }
}

</mosaic_0001>

<llo_original>
// kernel: tpu_custom_call.1
$region0: #{tpu_custom_call.1}
  #allocation0 [shape = 'u32[]', space=smem, size = 0x4, offset = 0x4, fixed_abs, tag = 'smem constant byte address 0x4 - core index']
  #allocation1 [shape = 'u32[72,128]{1,0:T(1,128)}', space=vmem, size = 0x9000, scoped, tag = 'internal scratch']
  %s0 = inlined_call_operand.hbm [shape: f32[16,32], index: 0, kind: input, shape index: {}]
  %s1 = inlined_call_operand.hbm [shape: f32[8,32], index: 1, kind: input, shape index: {}]
  %s2 = inlined_call_operand.hbm [shape: f32[16,32], index: 2, kind: output, shape index: {}]
  %s3 = sld [smem:[#allocation0]]
  $region49: #{tpu_custom_call.1} parent=0
    _
  %s5 = ssub.s32 1, %s3
  %s6 = scalar_select 0, %s5, %s3
  $region1: #{tpu_custom_call.1} parent=0
    #allocation2 [shape = 'u8[8192]{0}', space=vmem, size = 0x2000, scoped, tag = 'input window, operand 0']
    #allocation3 [shape = 's32[2]{0}', space=sflag, size = 0x8, scoped, tag = 'scoped memory for tpu_custom_call.1']
    #allocation4 [shape = 's32[2]{0}', space=sflag, size = 0x8, scoped, tag = 'scoped memory for tpu_custom_call.1']
    #allocation5 [shape = 'u8[4096]{0}', space=vmem, size = 0x1000, scoped, tag = 'input window, operand 1, single buffered']
    #allocation6 [shape = 's32[1]{0}', space=sflag, size = 0x4, scoped, tag = 'scoped memory for tpu_custom_call.1']
    #allocation7 [shape = 'u8[8192]{0}', space=vmem, size = 0x2000, scoped, tag = 'output window, operand 0']
    %7 = vsyncpa [#allocation3], 0
    %s8 = scalar_lea.sflag [#allocation3], 1
    %9 = vsyncpa %s8, 0
    %10 = vsyncpa [#allocation6], 0
    %11 = vsyncpa [#allocation4], 0
    %s12 = scalar_lea.sflag [#allocation4], 1
    %13 = vsyncpa %s12, 0
    loop: start=0, step=1, limit=4
    $region2: #{tpu_custom_call.1} parent=1 // loop_pre_header
      _
    $region3: #{tpu_custom_call.1} parent=1 // loop_header
      %s15 = sphi 0, %s19
      %p16 = scmp.ge.s32.totalorder %s15, 4
      %s22 = sphi 0, %s34
      %s23 = sphi 0, %s30
      %s24 = sphi 0, %s22
      %s25 = sphi 0, %s23
      %s26 = sphi 0, %s24
      %s27 = sphi 0, %s25
      %s39 = sphi 0, %s41
      %s42 = sphi 0, %s39
      %s43 = sphi 0, %s42
      %s59 = sphi 0, %s43
      %s65 = sphi 0, %s67
      %s68 = sphi 0, %s65
      %s69 = sphi 0, %s68
      %s85 = sphi 0, %s69
      %s93 = sphi 0, %s95
      %s96 = sphi 0, %s93
      %s97 = sphi 0, %s96
      %s113 = sphi 0, %s97
    $region4: #{tpu_custom_call.1} parent=1 // loop_header_branch
      %18 = sbr.rel (%p16) target = $region8
    $region5: #{tpu_custom_call.1} parent=1 // loop_body
      %s20 = ssub.s32 %s15, 1
      %s21 = ssub.s32 %s15, 2
      %s28 = sadd.s32 1, %s23
      %p29 = scmp.ge.s32.totalorder %s28, 2
      %s30 = scalar_select %p29, 0, %s28
      %s31 = sadd.s32 1, %s22
      %s32 = scalar_select %p29, %s31, %s22
      %p33 = scmp.ge.s32.totalorder %s32, 1
      %s34 = scalar_select %p33, 0, %s32
      %s35 = ssub.s32 %s23, %s30
      %s36 = ssub.s32 %s22, %s34
      %s37 = sor.u32 %s35, %s36
      %p38 = scmp.eq.s32.totalorder %s37, 0
      %s40 = sadd.s32 %s39, 1
      %s41 = scalar_select %p38, %s39, %s40
      %p44 = pneg %p38
      %p45 = scmp.eq.s32.totalorder %s15, 1
      %p46 = por %p44, %p45
      %p47 = scmp.ne.s32.totalorder %s39, %s42
      %p48 = scmp.eq.s32.totalorder %s15, 0
      %p49 = por %p47, %p48
      %p50 = scmp.ne.s32.totalorder %s39, %s42
      %p51 = scmp.eq.s32.totalorder %s20, 1
      %p52 = por %p50, %p51
      %p53 = scmp.ne.s32.totalorder %s42, %s43
      %p54 = scmp.eq.s32.totalorder %s20, 0
      %p55 = por %p53, %p54
      %p56 = scmp.ne.s32.totalorder %s42, %s43
      %p57 = scmp.eq.s32.totalorder %s21, 1
      %p58 = por %p56, %p57
      %p60 = scmp.ne.s32.totalorder %s43, %s59
      %p61 = scmp.eq.s32.totalorder %s21, 0
      %p62 = por %p60, %p61
      %s63 = ssub.s32 %s22, %s34
      %p64 = scmp.eq.s32.totalorder %s63, 0
      %s66 = sadd.s32 %s65, 1
      %s67 = scalar_select %p64, %s65, %s66
      %p70 = pneg %p64
      %p71 = scmp.eq.s32.totalorder %s15, 1
      %p72 = por %p70, %p71
      %p73 = scmp.ne.s32.totalorder %s65, %s68
      %p74 = scmp.eq.s32.totalorder %s15, 0
      %p75 = por %p73, %p74
      %p76 = scmp.ne.s32.totalorder %s65, %s68
      %p77 = scmp.eq.s32.totalorder %s20, 1
      %p78 = por %p76, %p77
      %p79 = scmp.ne.s32.totalorder %s68, %s69
      %p80 = scmp.eq.s32.totalorder %s20, 0
      %p81 = por %p79, %p80
      %p82 = scmp.ne.s32.totalorder %s68, %s69
      %p83 = scmp.eq.s32.totalorder %s21, 1
      %p84 = por %p82, %p83
      %p86 = scmp.ne.s32.totalorder %s69, %s85
      %p87 = scmp.eq.s32.totalorder %s21, 0
      %p88 = por %p86, %p87
      %s89 = ssub.s32 %s23, %s30
      %s90 = ssub.s32 %s22, %s34
      %s91 = sor.u32 %s89, %s90
      %p92 = scmp.eq.s32.totalorder %s91, 0
      %s94 = sadd.s32 %s93, 1
      %s95 = scalar_select %p92, %s93, %s94
      %p98 = pneg %p92
      %p99 = scmp.eq.s32.totalorder %s15, 1
      %p100 = por %p98, %p99
      %p101 = scmp.ne.s32.totalorder %s93, %s96
      %p102 = scmp.eq.s32.totalorder %s15, 0
      %p103 = por %p101, %p102
      %p104 = scmp.ne.s32.totalorder %s93, %s96
      %p105 = scmp.eq.s32.totalorder %s20, 1
      %p106 = por %p104, %p105
      %p107 = scmp.ne.s32.totalorder %s96, %s97
      %p108 = scmp.eq.s32.totalorder %s20, 0
      %p109 = por %p107, %p108
      %p110 = scmp.ne.s32.totalorder %s96, %s97
      %p111 = scmp.eq.s32.totalorder %s21, 1
      %p112 = por %p110, %p111
      %p114 = scmp.ne.s32.totalorder %s97, %s113
      %p115 = scmp.eq.s32.totalorder %s21, 0
      %p116 = por %p114, %p115
      %p117 = scmp.le.s32.totalorder 1, %s15
      %p118 = scmp.lt.s32.totalorder %s15, 3
      %p119 = pnand %p117, %p118
      %p120 = pneg %p119
      // Predicated region
      $region9: #{tpu_custom_call.1} parent=5 // pred_check
        _
      $region10: #{tpu_custom_call.1} parent=5 // pred_check_branch
        %122 = sbr.rel (%p119) target = $region12
      $region11: #{tpu_custom_call.1} parent=5 // pred_region
        %s123 = ssub.s32 %s15, 1
        // Predicated region
        $region13: #{tpu_custom_call.1} parent=11 // pred_check
          %p124 = pneg %p81
        $region14: #{tpu_custom_call.1} parent=11 // pred_check_branch
          %126 = sbr.rel (%p124) target = $region16
        $region15: #{tpu_custom_call.1} parent=11 // pred_region
          %128 = vsyncadd [#allocation6], 0
          %s129 = smul.addr %s24, 8
          %s130 = scalar_lea.hbm %s1, %s129
          %s132 = sshll.u32 %s130, 4
          %s133 = int_to_ptr.hbm [resolvable:$true] %s132
          %s134 = sshll.u32 [#allocation5], 4
          %s135 = int_to_ptr.vmem [resolvable:$true] %s134
          %137 = dma.hbm_to_vmem [thread:$0]  %s133, 128, %s135, [#allocation6]
        $region16: #{tpu_custom_call.1} parent=11 // pred_fallthru
          _
      $region12: #{tpu_custom_call.1} parent=5 // pred_fallthru
        _
      %p138 = scmp.lt.s32.totalorder %s15, 2
      // Predicated region
      $region17: #{tpu_custom_call.1} parent=5 // pred_check
        %p139 = pneg %p138
      $region18: #{tpu_custom_call.1} parent=5 // pred_check_branch
        %141 = sbr.rel (%p139) target = $region20
      $region19: #{tpu_custom_call.1} parent=5 // pred_region
        // Predicated region
        $region21: #{tpu_custom_call.1} parent=19 // pred_check
          %p142 = pneg %p49
        $region22: #{tpu_custom_call.1} parent=19 // pred_check_branch
          %144 = sbr.rel (%p142) target = $region24
        $region23: #{tpu_custom_call.1} parent=19 // pred_region
          %s145 = sand.u32 %s39, 1
          %s146 = scalar_lea.sflag [#allocation3], %s145
          %s147 = sand.u32 %s39, 1
          %s148 = smul.addr %s147, 8
          %s149 = scalar_lea.vmem [#allocation2], %s148
          %151 = vsyncadd %s146, 0
          %s152 = sadd.s32 %s22, %s23
          %s153 = smul.addr %s152, 8
          %s154 = scalar_lea.hbm %s0, %s153
          %s156 = sshll.u32 %s154, 4
          %s157 = int_to_ptr.hbm [resolvable:$true] %s156
          %s158 = sshll.u32 %s149, 4
          %s159 = int_to_ptr.vmem [resolvable:$true] %s158
          %161 = dma.hbm_to_vmem [thread:$0]  %s157, 128, %s159, %s146
        $region24: #{tpu_custom_call.1} parent=19 // pred_fallthru
          _
      $region20: #{tpu_custom_call.1} parent=5 // pred_fallthru
        _
      %p162 = scmp.le.s32.totalorder 1, %s15
      %p163 = scmp.lt.s32.totalorder %s15, 3
      %p164 = pnand %p162, %p163
      %p165 = pneg %p164
      // Predicated region
      $region25: #{tpu_custom_call.1} parent=5 // pred_check
        _
      $region26: #{tpu_custom_call.1} parent=5 // pred_check_branch
        %167 = sbr.rel (%p164) target = $region28
      $region27: #{tpu_custom_call.1} parent=5 // pred_region
        %s168 = ssub.s32 %s15, 1
        %s169 = sand.u32 %s42, 1
        %s170 = scalar_lea.sflag [#allocation3], %s169
        %s171 = sand.u32 %s42, 1
        %s172 = smul.addr %s171, 8
        %s173 = scalar_lea.vmem [#allocation2], %s172
        // Predicated region
        $region29: #{tpu_custom_call.1} parent=27 // pred_check
          %p174 = pneg %p55
        $region30: #{tpu_custom_call.1} parent=27 // pred_check_branch
          %176 = sbr.rel (%p174) target = $region32
        $region31: #{tpu_custom_call.1} parent=27 // pred_region
          %178 = dma.done %s170, 128
        $region32: #{tpu_custom_call.1} parent=27 // pred_fallthru
          _
        // Predicated region
        $region33: #{tpu_custom_call.1} parent=27 // pred_check
          %p179 = pneg %p81
        $region34: #{tpu_custom_call.1} parent=27 // pred_check_branch
          %181 = sbr.rel (%p179) target = $region36
        $region35: #{tpu_custom_call.1} parent=27 // pred_region
          %183 = dma.done [#allocation6], 128
        $region36: #{tpu_custom_call.1} parent=27 // pred_fallthru
          _
        %s184 = sand.u32 %s42, 1
        %s185 = scalar_lea.sflag [#allocation3], %s184
        %s186 = sand.u32 %s42, 1
        %s187 = smul.addr %s186, 8
        %s188 = scalar_lea.vmem [#allocation2], %s187
        %p189 = pneg %p55
        %p190 = pneg %p52
        %p191 = pneg %p81
        %p192 = pneg %p78
        %p193 = pneg %p109
        %p194 = pneg %p106
        %s195 = sand.u32 %s96, 1
        %s196 = scalar_lea.sflag [#allocation4], %s195
        %s197 = sand.u32 %s96, 1
        %s198 = smul.addr %s197, 8
        %s199 = scalar_lea.vmem [#allocation7], %s198
        %v200 = vld [vmem:[%s173] sm:$0xff]
        %v201 = vld [vmem:[#allocation5] sm:$0xff]
        %v202 = vadd.f32 %v200, %v201
        %vm203 = vcmask 261120
        %204 = vst.msk [vmem:[%s199] sm:$0xff] %vm203, %v202
        %s205 = sand.u32 %s96, 1
        %s206 = scalar_lea.sflag [#allocation4], %s205
        %s207 = sand.u32 %s96, 1
        %s208 = smul.addr %s207, 8
        %s209 = scalar_lea.vmem [#allocation7], %s208
        // Predicated region
        $region37: #{tpu_custom_call.1} parent=27 // pred_check
          %p210 = pneg %p106
        $region38: #{tpu_custom_call.1} parent=27 // pred_check_branch
          %212 = sbr.rel (%p210) target = $region40
        $region39: #{tpu_custom_call.1} parent=27 // pred_region
          %214 = vsyncadd %s206, 0
          %s215 = sadd.s32 %s24, %s25
          %s216 = smul.addr %s215, 8
          %s217 = scalar_lea.hbm %s2, %s216
          %s219 = sshll.u32 %s209, 4
          %s220 = int_to_ptr.vmem [resolvable:$true] %s219
          %s221 = sshll.u32 %s217, 4
          %s222 = int_to_ptr.hbm [resolvable:$true] %s221
          %224 = dma.vmem_to_hbm [thread:$0]  %s220, 128, %s222, %s206
        $region40: #{tpu_custom_call.1} parent=27 // pred_fallthru
          _
      $region28: #{tpu_custom_call.1} parent=5 // pred_fallthru
        _
      %p225 = scmp.le.s32.totalorder 2, %s15
      // Predicated region
      $region41: #{tpu_custom_call.1} parent=5 // pred_check
        %p226 = pneg %p225
      $region42: #{tpu_custom_call.1} parent=5 // pred_check_branch
        %228 = sbr.rel (%p226) target = $region44
      $region43: #{tpu_custom_call.1} parent=5 // pred_region
        %s229 = ssub.s32 %s15, 2
        // Predicated region
        $region45: #{tpu_custom_call.1} parent=43 // pred_check
          %p230 = pneg %p112
        $region46: #{tpu_custom_call.1} parent=43 // pred_check_branch
          %232 = sbr.rel (%p230) target = $region48
        $region47: #{tpu_custom_call.1} parent=43 // pred_region
          %s233 = sand.u32 %s97, 1
          %s234 = scalar_lea.sflag [#allocation4], %s233
          %s235 = sand.u32 %s97, 1
          %s236 = smul.addr %s235, 8
          %s237 = scalar_lea.vmem [#allocation7], %s236
          %239 = dma.done %s234, 128
        $region48: #{tpu_custom_call.1} parent=43 // pred_fallthru
          _
      $region44: #{tpu_custom_call.1} parent=5 // pred_fallthru
        _
    $region6: #{tpu_custom_call.1} parent=1 // loop_footer
      %s19 = sadd.s32 1, %s15
    $region7: #{tpu_custom_call.1} parent=1 // loop_footer_branch
      %14 = sbr.rel target = $region3
    $region8: #{tpu_custom_call.1} parent=1 // loop_exit
      _
    %240 = vsyncpa [#allocation3], 1
    %s241 = scalar_lea.sflag [#allocation3], 1
    %242 = vsyncpa %s241, 1
    %243 = vsyncpa [#allocation6], 1
    %244 = vsyncpa [#allocation4], 1
    %s245 = scalar_lea.sflag [#allocation4], 1
    %246 = vsyncpa %s245, 1

</llo_original>
